<compile_context>
chip_gen: v6e
topology: v6e:2x2x1
jax: 0.10.0
libtpu: 0.0.40
codegen_flags: <defaults>
</compile_context>

<pallas_src>
import functools

import jax
import jax.numpy as jnp
from jax.experimental import pallas as pl
from jax.experimental.pallas import tpu as pltpu


# ---------------------------------------------------------------------------
# Fused kernel: conv1 + ReLU + conv2 + ReLU + final layout, one batch per step.
# ---------------------------------------------------------------------------
def _fused_subsample_kernel(x_ref, w1_ref, b1_ref, w2_ref, b2_ref, o_ref, *, T1, T2):
    """x_ref : (1, 2, T//2, F*C_in)    time-phase-split input, K-order (freq u, c_in)
       w1_ref: (3, F*C_in, C_mid*F1)   banded conv1 weights, one slab per kernel row di
       b1_ref: (1, C_mid*F1)
       w2_ref: (3, C_mid*F1, C_mid*F2) banded conv2 weights
       b2_ref: (1, C_mid*F2)
       o_ref : (1, T2, C_mid*F2)       final (B, T2, C*F2) layout (permute already fused)
    """
    f32 = jnp.float32
    cdt = w1_ref.dtype                        # MXU compute dtype (bf16 or f32)

    # ---- conv1 + bias + ReLU: 3 banded matmuls (one per kernel row di) ----
    acc1 = b1_ref[...].astype(f32)            # (1, N1), broadcasts to (T1, N1)
    for di in range(3):
        lhs = x_ref[0, di % 2, di // 2: di // 2 + T1, :]          # (T1, F*C_in) contiguous
        acc1 = acc1 + jnp.dot(lhs, w1_ref[di], preferred_element_type=f32)
    y1 = jnp.maximum(acc1, 0.0).astype(cdt)   # (T1, C_mid*F1); never leaves the core

    # ---- conv2 + bias + ReLU: 3 banded matmuls; stride-2 rows via contiguous row slices ----
    acc2 = b2_ref[...].astype(f32)            # (1, N2), broadcasts to (T2, N2)
    for di in range(3):
        rows = [y1[di + 2 * t2: di + 2 * t2 + 1, :] for t2 in range(T2)]
        lhs2 = jnp.concatenate(rows, axis=0)                       # (T2, C_mid*F1)
        acc2 = acc2 + jnp.dot(lhs2, w2_ref[di], preferred_element_type=f32)
    y2 = jnp.maximum(acc2, 0.0)               # (T2, C_mid*F2), f32 epilogue

    # Final permute(0,2,1,3)+flatten is already encoded in the weight column order.
    o_ref[0] = y2.astype(o_ref.dtype)


# ---------------------------------------------------------------------------
# Wrapper: input phase-split + banded-weight construction + pallas_call.
# ---------------------------------------------------------------------------
def conv2d_subsampling(x, params, *, compute_dtype=jnp.bfloat16):
    """Fused Conv2dSubampling.forward: x (B, C_in, T, F) -> (B, T2, C_mid*F2)."""
    w1, b1, w2, b2 = params
    B, C_in, T, F = x.shape
    C_mid = w1.shape[0]
    assert T % 2 == 0, "time axis must be even for the stride-2 phase split"
    T1, F1 = (T - 3) // 2 + 1, (F - 3) // 2 + 1
    T2, F2 = (T1 - 3) // 2 + 1, (F1 - 3) // 2 + 1
    K1, N1, N2 = F * C_in, C_mid * F1, C_mid * F2

    # Input: phase-split the stride-2 time axis, fuse (freq, c_in) as the matmul K dim.
    #   x_r[b, p, i, u*C_in + c] = x[b, c, 2*i + p, u]   (pure permutation, no expansion)
    x_r = (x.transpose(0, 2, 3, 1)                 # (B, T, F, C_in)
             .reshape(B, T // 2, 2, F, C_in)       # t = 2*i + p
             .transpose(0, 2, 1, 3, 4)             # (B, 2, T//2, F, C_in)
             .reshape(B, 2, T // 2, K1)
             .astype(compute_dtype))

    # Banded (Toeplitz) weight slabs — built once from the 3x3 kernels (constant-foldable;
    # in a real model these would be precomputed once per checkpoint).
    # W1e[di, u*C_in + ci, c*F1 + f] = w1[c, ci, di, u - 2*f]  when 0 <= u-2f <= 2, else 0
    W1e = jnp.zeros((3, K1, N1), jnp.float32)
    for di in range(3):
        for f in range(F1):
            for dj in range(3):
                u = 2 * f + dj
                W1e = W1e.at[di, u * C_in:(u + 1) * C_in, f::F1].set(w1[:, :, di, dj].T)
    # W2e[di, ci*F1 + s, c*F2 + f2] = w2[c, ci, di, s - 2*f2]; the (c, f2) column order
    # bakes the module's final permute+flatten directly into the matmul output.
    W2e = jnp.zeros((3, N1, N2), jnp.float32)
    for di in range(3):
        for f2 in range(F2):
            for dj in range(3):
                s = 2 * f2 + dj
                W2e = W2e.at[di, s::F1, f2::F2].set(w2[:, :, di, dj].T)
    W1e = W1e.astype(compute_dtype)
    W2e = W2e.astype(compute_dtype)
    b1e = jnp.repeat(b1, F1).reshape(1, N1).astype(jnp.float32)
    b2e = jnp.repeat(b2, F2).reshape(1, N2).astype(jnp.float32)

    kernel = functools.partial(_fused_subsample_kernel, T1=T1, T2=T2)
    return pl.pallas_call(
        kernel,
        out_shape=jax.ShapeDtypeStruct((B, T2, N2), jnp.float32),
        grid=(B,),
        in_specs=[
            pl.BlockSpec((1, 2, T // 2, K1), lambda b: (b, 0, 0, 0)),
            pl.BlockSpec((3, K1, N1), lambda b: (0, 0, 0)),
            pl.BlockSpec((1, N1), lambda b: (0, 0)),
            pl.BlockSpec((3, N1, N2), lambda b: (0, 0, 0)),
            pl.BlockSpec((1, N2), lambda b: (0, 0)),
        ],
        out_specs=pl.BlockSpec((1, T2, N2), lambda b: (b, 0, 0)),
        compiler_params=pltpu.CompilerParams(
            dimension_semantics=("parallel",)),   # shard batch across TCs on v7x
    )(x_r, W1e, b1e, W2e, b2e)


# ---------------------------------------------------------------------------
# Driver
# ---------------------------------------------------------------------------
if __name__ == "__main__":
    in_channels, freq_dim_magnification = 4, 8
    B, T, F = 2, 16, 16

    key = jax.random.PRNGKey(0)
    k1, k2, k3, k4, kx = jax.random.split(key, 5)

    # Deterministic "PyTorch-like" uniform(-1/sqrt(fan_in), 1/sqrt(fan_in)) init.
    fan1 = in_channels * 3 * 3
    fan2 = freq_dim_magnification * 3 * 3
    w1 = jax.random.uniform(k1, (freq_dim_magnification, in_channels, 3, 3),
                            jnp.float32, -1.0, 1.0) / jnp.sqrt(fan1)
    b1 = jax.random.uniform(k2, (freq_dim_magnification,),
                            jnp.float32, -1.0, 1.0) / jnp.sqrt(fan1)
    w2 = jax.random.uniform(k3, (freq_dim_magnification, freq_dim_magnification, 3, 3),
                            jnp.float32, -1.0, 1.0) / jnp.sqrt(fan2)
    b2 = jax.random.uniform(k4, (freq_dim_magnification,),
                            jnp.float32, -1.0, 1.0) / jnp.sqrt(fan2)

    x = jax.random.normal(kx, (B, in_channels, T, F), jnp.float32)
    params = (w1, b1, w2, b2)

    # Pure-JAX reference (lax conv) for correctness checking.
    def ref_conv(xx, w, b):
        y = jax.lax.conv_general_dilated(
            xx, w, window_strides=(2, 2), padding="VALID",
            dimension_numbers=("NCHW", "OIHW", "NCHW"))
        return jnp.maximum(y + b[None, :, None, None], 0.0)

    yr = ref_conv(ref_conv(x, w1, b1), w2, b2)
    Br, Cr, Tr, Fr = yr.shape
    ref = yr.transpose(0, 2, 1, 3).reshape(Br, Tr, Cr * Fr)

    fwd = jax.jit(conv2d_subsampling, static_argnames=("compute_dtype",))

    # Exact-math path (f32 MXU operands): tight tolerance.
    out_f32 = jax.block_until_ready(fwd(x, params, compute_dtype=jnp.float32))
    assert out_f32.shape == ref.shape, (out_f32.shape, ref.shape)
    assert jnp.allclose(out_f32, ref, atol=1e-4, rtol=1e-4), "f32 mismatch vs reference"

    # Default path: bf16 MXU operands, f32 accumulation/epilogue (per perf review);
    # tolerance reflects bf16 rounding of the matmul operands only.
    out = jax.block_until_ready(fwd(x, params, compute_dtype=jnp.bfloat16))
    assert out.shape == (B, (T - 3) // 2 // 2 + 0 + ((((T - 3) // 2 + 1) - 3) // 2 + 1) * 0
                         + (((T - 3) // 2 + 1 - 3) // 2 + 1) - (((T - 3) // 2 + 1 - 3) // 2 + 1)
                         + (((T - 3) // 2 + 1 - 3) // 2 + 1),
                         freq_dim_magnification * (((F - 3) // 2 + 1 - 3) // 2 + 1)) or True
    assert out.shape == ref.shape, (out.shape, ref.shape)
    assert jnp.allclose(out, ref, atol=3e-2, rtol=3e-2), "bf16 mismatch vs reference"

    print("KERNEL_OK")
</pallas_src>

<mosaic_0001>
module attributes {stable_mosaic.version = 11 : i64} {
  func.func @_fused_subsample_kernel(%arg0: i32, %arg1: memref<1x2x8x64xf32, #tpu.memory_space<vmem>>, %arg2: memref<3x64x56xf32, #tpu.memory_space<vmem>>, %arg3: memref<1x56xf32, #tpu.memory_space<vmem>>, %arg4: memref<3x56x24xf32, #tpu.memory_space<vmem>>, %arg5: memref<1x24xf32, #tpu.memory_space<vmem>>, %arg6: memref<1x3x24xf32, #tpu.memory_space<vmem>>) attributes {dimension_semantics = [#tpu.dimension_semantics<parallel>], iteration_bounds = array<i64: 2>, scalar_prefetch = 0 : i64, scratch_operands = 0 : i64, tpu.core_type = #tpu.core_type<tc>, window_params = [{transform_indices = @transform_0, window_bounds = array<i64: 1, 2, 8, 64>}, {pipeline_mode = #tpu.pipeline_mode<synchronous>, transform_indices = @transform_1, window_bounds = array<i64: 3, 64, 56>}, {pipeline_mode = #tpu.pipeline_mode<synchronous>, transform_indices = @transform_2, window_bounds = array<i64: 1, 56>}, {pipeline_mode = #tpu.pipeline_mode<synchronous>, transform_indices = @transform_3, window_bounds = array<i64: 3, 56, 24>}, {pipeline_mode = #tpu.pipeline_mode<synchronous>, transform_indices = @transform_4, window_bounds = array<i64: 1, 24>}, {transform_indices = @transform_5, window_bounds = array<i64: 1, 3, 24>}]} {
    %c0 = arith.constant 0 : index
    %c0_0 = arith.constant 0 : index
    %0 = vector.load %arg3[%c0, %c0_0] : memref<1x56xf32, #tpu.memory_space<vmem>>, vector<1x56xf32>
    %c0_1 = arith.constant 0 : index
    %c0_2 = arith.constant 0 : index
    %c0_3 = arith.constant 0 : index
    %c0_4 = arith.constant 0 : index
    %1 = vector.load %arg1[%c0_1, %c0_2, %c0_3, %c0_4] : memref<1x2x8x64xf32, #tpu.memory_space<vmem>>, vector<1x1x7x64xf32>
    %2 = vector.shape_cast %1 : vector<1x1x7x64xf32> to vector<7x64xf32>
    %c0_5 = arith.constant 0 : index
    %c0_6 = arith.constant 0 : index
    %c0_7 = arith.constant 0 : index
    %3 = vector.load %arg2[%c0_5, %c0_6, %c0_7] : memref<3x64x56xf32, #tpu.memory_space<vmem>>, vector<1x64x56xf32>
    %4 = vector.shape_cast %3 : vector<1x64x56xf32> to vector<64x56xf32>
    %cst = arith.constant dense<0.000000e+00> : vector<7x56xf32>
    %5 = tpu.matmul %2, %4, %cst {dimension_numbers = #tpu.dot_dimension_numbers<[1], [0], [0], [1], [0, 0, 1, 1], [], []>} : vector<7x64xf32>, vector<64x56xf32>, vector<7x56xf32> -> vector<7x56xf32>
    %6 = vector.broadcast %0 : vector<1x56xf32> to vector<7x56xf32>
    %7 = arith.addf %6, %5 : vector<7x56xf32>
    %c0_8 = arith.constant 0 : index
    %c1 = arith.constant 1 : index
    %c0_9 = arith.constant 0 : index
    %c0_10 = arith.constant 0 : index
    %8 = vector.load %arg1[%c0_8, %c1, %c0_9, %c0_10] : memref<1x2x8x64xf32, #tpu.memory_space<vmem>>, vector<1x1x7x64xf32>
    %9 = vector.shape_cast %8 : vector<1x1x7x64xf32> to vector<7x64xf32>
    %c1_11 = arith.constant 1 : index
    %c0_12 = arith.constant 0 : index
    %c0_13 = arith.constant 0 : index
    %10 = vector.load %arg2[%c1_11, %c0_12, %c0_13] : memref<3x64x56xf32, #tpu.memory_space<vmem>>, vector<1x64x56xf32>
    %11 = vector.shape_cast %10 : vector<1x64x56xf32> to vector<64x56xf32>
    %cst_14 = arith.constant dense<0.000000e+00> : vector<7x56xf32>
    %12 = tpu.matmul %9, %11, %cst_14 {dimension_numbers = #tpu.dot_dimension_numbers<[1], [0], [0], [1], [0, 0, 1, 1], [], []>} : vector<7x64xf32>, vector<64x56xf32>, vector<7x56xf32> -> vector<7x56xf32>
    %13 = arith.addf %7, %12 : vector<7x56xf32>
    %c0_15 = arith.constant 0 : index
    %c0_16 = arith.constant 0 : index
    %c1_17 = arith.constant 1 : index
    %c0_18 = arith.constant 0 : index
    %14 = vector.load %arg1[%c0_15, %c0_16, %c1_17, %c0_18] : memref<1x2x8x64xf32, #tpu.memory_space<vmem>>, vector<1x1x7x64xf32>
    %15 = vector.shape_cast %14 : vector<1x1x7x64xf32> to vector<7x64xf32>
    %c2 = arith.constant 2 : index
    %c0_19 = arith.constant 0 : index
    %c0_20 = arith.constant 0 : index
    %16 = vector.load %arg2[%c2, %c0_19, %c0_20] : memref<3x64x56xf32, #tpu.memory_space<vmem>>, vector<1x64x56xf32>
    %17 = vector.shape_cast %16 : vector<1x64x56xf32> to vector<64x56xf32>
    %cst_21 = arith.constant dense<0.000000e+00> : vector<7x56xf32>
    %18 = tpu.matmul %15, %17, %cst_21 {dimension_numbers = #tpu.dot_dimension_numbers<[1], [0], [0], [1], [0, 0, 1, 1], [], []>} : vector<7x64xf32>, vector<64x56xf32>, vector<7x56xf32> -> vector<7x56xf32>
    %19 = arith.addf %13, %18 : vector<7x56xf32>
    %cst_22 = arith.constant 0.000000e+00 : f32
    %20 = vector.broadcast %cst_22 : f32 to vector<7x56xf32>
    %21 = arith.maximumf %19, %20 : vector<7x56xf32>
    %c0_23 = arith.constant 0 : index
    %c0_24 = arith.constant 0 : index
    %22 = vector.load %arg5[%c0_23, %c0_24] : memref<1x24xf32, #tpu.memory_space<vmem>>, vector<1x24xf32>
    %23 = vector.extract_strided_slice %21 {offsets = [0, 0], sizes = [1, 56], strides = [1, 1]} : vector<7x56xf32> to vector<1x56xf32>
    %24 = vector.extract_strided_slice %21 {offsets = [2, 0], sizes = [1, 56], strides = [1, 1]} : vector<7x56xf32> to vector<1x56xf32>
    %25 = vector.extract_strided_slice %21 {offsets = [4, 0], sizes = [1, 56], strides = [1, 1]} : vector<7x56xf32> to vector<1x56xf32>
    %26 = tpu.concatenate %23, %24, %25 in 0 : vector<1x56xf32>, vector<1x56xf32>, vector<1x56xf32> -> vector<3x56xf32>
    %c0_25 = arith.constant 0 : index
    %c0_26 = arith.constant 0 : index
    %c0_27 = arith.constant 0 : index
    %27 = vector.load %arg4[%c0_25, %c0_26, %c0_27] : memref<3x56x24xf32, #tpu.memory_space<vmem>>, vector<1x56x24xf32>
    %28 = vector.shape_cast %27 : vector<1x56x24xf32> to vector<56x24xf32>
    %cst_28 = arith.constant dense<0.000000e+00> : vector<3x24xf32>
    %29 = tpu.matmul %26, %28, %cst_28 {dimension_numbers = #tpu.dot_dimension_numbers<[1], [0], [0], [1], [0, 0, 1, 1], [], []>} : vector<3x56xf32>, vector<56x24xf32>, vector<3x24xf32> -> vector<3x24xf32>
    %30 = vector.broadcast %22 : vector<1x24xf32> to vector<3x24xf32>
    %31 = arith.addf %30, %29 : vector<3x24xf32>
    %32 = vector.extract_strided_slice %21 {offsets = [1, 0], sizes = [1, 56], strides = [1, 1]} : vector<7x56xf32> to vector<1x56xf32>
    %33 = vector.extract_strided_slice %21 {offsets = [3, 0], sizes = [1, 56], strides = [1, 1]} : vector<7x56xf32> to vector<1x56xf32>
    %34 = vector.extract_strided_slice %21 {offsets = [5, 0], sizes = [1, 56], strides = [1, 1]} : vector<7x56xf32> to vector<1x56xf32>
    %35 = tpu.concatenate %32, %33, %34 in 0 : vector<1x56xf32>, vector<1x56xf32>, vector<1x56xf32> -> vector<3x56xf32>
    %c1_29 = arith.constant 1 : index
    %c0_30 = arith.constant 0 : index
    %c0_31 = arith.constant 0 : index
    %36 = vector.load %arg4[%c1_29, %c0_30, %c0_31] : memref<3x56x24xf32, #tpu.memory_space<vmem>>, vector<1x56x24xf32>
    %37 = vector.shape_cast %36 : vector<1x56x24xf32> to vector<56x24xf32>
    %cst_32 = arith.constant dense<0.000000e+00> : vector<3x24xf32>
    %38 = tpu.matmul %35, %37, %cst_32 {dimension_numbers = #tpu.dot_dimension_numbers<[1], [0], [0], [1], [0, 0, 1, 1], [], []>} : vector<3x56xf32>, vector<56x24xf32>, vector<3x24xf32> -> vector<3x24xf32>
    %39 = arith.addf %31, %38 : vector<3x24xf32>
    %40 = vector.extract_strided_slice %21 {offsets = [2, 0], sizes = [1, 56], strides = [1, 1]} : vector<7x56xf32> to vector<1x56xf32>
    %41 = vector.extract_strided_slice %21 {offsets = [4, 0], sizes = [1, 56], strides = [1, 1]} : vector<7x56xf32> to vector<1x56xf32>
    %42 = vector.extract_strided_slice %21 {offsets = [6, 0], sizes = [1, 56], strides = [1, 1]} : vector<7x56xf32> to vector<1x56xf32>
    %43 = tpu.concatenate %40, %41, %42 in 0 : vector<1x56xf32>, vector<1x56xf32>, vector<1x56xf32> -> vector<3x56xf32>
    %c2_33 = arith.constant 2 : index
    %c0_34 = arith.constant 0 : index
    %c0_35 = arith.constant 0 : index
    %44 = vector.load %arg4[%c2_33, %c0_34, %c0_35] : memref<3x56x24xf32, #tpu.memory_space<vmem>>, vector<1x56x24xf32>
    %45 = vector.shape_cast %44 : vector<1x56x24xf32> to vector<56x24xf32>
    %cst_36 = arith.constant dense<0.000000e+00> : vector<3x24xf32>
    %46 = tpu.matmul %43, %45, %cst_36 {dimension_numbers = #tpu.dot_dimension_numbers<[1], [0], [0], [1], [0, 0, 1, 1], [], []>} : vector<3x56xf32>, vector<56x24xf32>, vector<3x24xf32> -> vector<3x24xf32>
    %47 = arith.addf %39, %46 : vector<3x24xf32>
    %cst_37 = arith.constant 0.000000e+00 : f32
    %48 = vector.broadcast %cst_37 : f32 to vector<3x24xf32>
    %49 = arith.maximumf %47, %48 : vector<3x24xf32>
    %c0_38 = arith.constant 0 : index
    %c0_39 = arith.constant 0 : index
    %c0_40 = arith.constant 0 : index
    %50 = vector.load %arg6[%c0_38, %c0_39, %c0_40] : memref<1x3x24xf32, #tpu.memory_space<vmem>>, vector<1x3x24xf32>
    %51 = vector.shape_cast %50 : vector<1x3x24xf32> to vector<3x24xf32>
    %52 = vector.shape_cast %49 : vector<3x24xf32> to vector<1x3x24xf32>
    tpu.vector_store %arg6[%c0_38, %c0_39, %c0_40], %52 {strides = array<i32>} : memref<1x3x24xf32, #tpu.memory_space<vmem>>, vector<1x3x24xf32>,
    return
  }
  func.func @transform_0(%arg0: i32) -> (i32, i32, i32, i32) {
    %c0_i32 = arith.constant 0 : i32
    %c0_i32_0 = arith.constant 0 : i32
    %c0_i32_1 = arith.constant 0 : i32
    %c0_i32_2 = arith.constant 0 : i32
    return %arg0, %c0_i32, %c0_i32_0, %c0_i32_1 : i32, i32, i32, i32
  }
  func.func @transform_1(%arg0: i32) -> (i32, i32, i32) {
    %c0_i32 = arith.constant 0 : i32
    %c0_i32_0 = arith.constant 0 : i32
    %c0_i32_1 = arith.constant 0 : i32
    %c0_i32_2 = arith.constant 0 : i32
    return %c0_i32, %c0_i32_0, %c0_i32_1 : i32, i32, i32
  }
  func.func @transform_2(%arg0: i32) -> (i32, i32) {
    %c0_i32 = arith.constant 0 : i32
    %c0_i32_0 = arith.constant 0 : i32
    %c0_i32_1 = arith.constant 0 : i32
    return %c0_i32, %c0_i32_0 : i32, i32
  }
  func.func @transform_3(%arg0: i32) -> (i32, i32, i32) {
    %c0_i32 = arith.constant 0 : i32
    %c0_i32_0 = arith.constant 0 : i32
    %c0_i32_1 = arith.constant 0 : i32
    %c0_i32_2 = arith.constant 0 : i32
    return %c0_i32, %c0_i32_0, %c0_i32_1 : i32, i32, i32
  }
  func.func @transform_4(%arg0: i32) -> (i32, i32) {
    %c0_i32 = arith.constant 0 : i32
    %c0_i32_0 = arith.constant 0 : i32
    %c0_i32_1 = arith.constant 0 : i32
    return %c0_i32, %c0_i32_0 : i32, i32
  }
  func.func @transform_5(%arg0: i32) -> (i32, i32, i32) {
    %c0_i32 = arith.constant 0 : i32
    %c0_i32_0 = arith.constant 0 : i32
    %c0_i32_1 = arith.constant 0 : i32
    return %arg0, %c0_i32, %c0_i32_0 : i32, i32, i32
  }
}

</mosaic_0001>

<llo_original>
// kernel: conv2d_subsampling.1
$region0: #{conv2d_subsampling.1}
  #allocation0 [shape = 'u32[]', space=smem, size = 0x4, offset = 0x4, fixed_abs, tag = 'smem constant byte address 0x4 - core index']
  #allocation1 [shape = 'u32[144,128]{1,0:T(1,128)}', space=vmem, size = 0x12000, scoped, tag = 'internal scratch']
  %s0 = inlined_call_operand.vmem [shape: f32[2,2,8,64], index: 0, kind: input, shape index: {}]
  %s1 = inlined_call_operand.vmem [shape: f32[3,64,56], index: 1, kind: input, shape index: {}]
  %s2 = inlined_call_operand.vmem [shape: f32[1,56], index: 2, kind: input, shape index: {}]
  %s3 = inlined_call_operand.vmem [shape: f32[3,56,24], index: 3, kind: input, shape index: {}]
  %s4 = inlined_call_operand.vmem [shape: f32[1,24], index: 4, kind: input, shape index: {}]
  %s5 = inlined_call_operand.vmem [shape: f32[2,3,24], index: 5, kind: output, shape index: {}]
  %s6 = sld [smem:[#allocation0]]
  $region53: #{conv2d_subsampling.1} parent=0
    _
  %s8 = ssub.s32 1, %s6
  %s9 = scalar_select 0, %s8, %s6
  loop: start=0, step=1, limit=4
  $region2: #{conv2d_subsampling.1} parent=0 // loop_pre_header
    _
  $region3: #{conv2d_subsampling.1} parent=0 // loop_header
    %s11 = sphi 0, %s15
    %p12 = scmp.ge.s32.totalorder %s11, 4
    %s21 = sphi 0, %s23
    %s24 = sphi 0, %s21
    %s25 = sphi 0, %s24
    %s41 = sphi 0, %s25
    %s45 = sphi 0, %s45
    %s47 = sphi 0, %s45
    %s48 = sphi 0, %s47
    %s62 = sphi 0, %s48
    %s66 = sphi 0, %s66
    %s68 = sphi 0, %s66
    %s69 = sphi 0, %s68
    %s83 = sphi 0, %s69
    %s87 = sphi 0, %s87
    %s89 = sphi 0, %s87
    %s90 = sphi 0, %s89
    %s104 = sphi 0, %s90
    %s108 = sphi 0, %s108
    %s110 = sphi 0, %s108
    %s111 = sphi 0, %s110
    %s125 = sphi 0, %s111
    %s131 = sphi 0, %s133
    %s134 = sphi 0, %s131
    %s135 = sphi 0, %s134
    %s151 = sphi 0, %s135
  $region4: #{conv2d_subsampling.1} parent=0 // loop_header_branch
    %14 = sbr.rel (%p12) target = $region8
  $region5: #{conv2d_subsampling.1} parent=0 // loop_body
    %s16 = ssub.s32 %s11, 1
    %s17 = ssub.s32 %s11, 2
    %s18 = sadd.s32 %s11, 1
    %s19 = ssub.s32 %s11, %s18
    %p20 = scmp.eq.s32.totalorder %s19, 0
    %s22 = sadd.s32 %s21, 1
    %s23 = scalar_select %p20, %s21, %s22
    %p26 = pneg %p20
    %p27 = scmp.eq.s32.totalorder %s11, 1
    %p28 = por %p26, %p27
    %p29 = scmp.ne.s32.totalorder %s21, %s24
    %p30 = scmp.eq.s32.totalorder %s11, 0
    %p31 = por %p29, %p30
    %p32 = scmp.ne.s32.totalorder %s21, %s24
    %p33 = scmp.eq.s32.totalorder %s16, 1
    %p34 = por %p32, %p33
    %p35 = scmp.ne.s32.totalorder %s24, %s25
    %p36 = scmp.eq.s32.totalorder %s16, 0
    %p37 = por %p35, %p36
    %p38 = scmp.ne.s32.totalorder %s24, %s25
    %p39 = scmp.eq.s32.totalorder %s17, 1
    %p40 = por %p38, %p39
    %p42 = scmp.ne.s32.totalorder %s25, %s41
    %p43 = scmp.eq.s32.totalorder %s17, 0
    %p44 = por %p42, %p43
    %s46 = sadd.s32 %s45, 1
    %p49 = scmp.eq.s32.totalorder %s11, 1
    %p50 = scmp.ne.s32.totalorder %s45, %s47
    %p51 = scmp.eq.s32.totalorder %s11, 0
    %p52 = por %p50, %p51
    %p53 = scmp.ne.s32.totalorder %s45, %s47
    %p54 = scmp.eq.s32.totalorder %s16, 1
    %p55 = por %p53, %p54
    %p56 = scmp.ne.s32.totalorder %s47, %s48
    %p57 = scmp.eq.s32.totalorder %s16, 0
    %p58 = por %p56, %p57
    %p59 = scmp.ne.s32.totalorder %s47, %s48
    %p60 = scmp.eq.s32.totalorder %s17, 1
    %p61 = por %p59, %p60
    %p63 = scmp.ne.s32.totalorder %s48, %s62
    %p64 = scmp.eq.s32.totalorder %s17, 0
    %p65 = por %p63, %p64
    %s67 = sadd.s32 %s66, 1
    %p70 = scmp.eq.s32.totalorder %s11, 1
    %p71 = scmp.ne.s32.totalorder %s66, %s68
    %p72 = scmp.eq.s32.totalorder %s11, 0
    %p73 = por %p71, %p72
    %p74 = scmp.ne.s32.totalorder %s66, %s68
    %p75 = scmp.eq.s32.totalorder %s16, 1
    %p76 = por %p74, %p75
    %p77 = scmp.ne.s32.totalorder %s68, %s69
    %p78 = scmp.eq.s32.totalorder %s16, 0
    %p79 = por %p77, %p78
    %p80 = scmp.ne.s32.totalorder %s68, %s69
    %p81 = scmp.eq.s32.totalorder %s17, 1
    %p82 = por %p80, %p81
    %p84 = scmp.ne.s32.totalorder %s69, %s83
    %p85 = scmp.eq.s32.totalorder %s17, 0
    %p86 = por %p84, %p85
    %s88 = sadd.s32 %s87, 1
    %p91 = scmp.eq.s32.totalorder %s11, 1
    %p92 = scmp.ne.s32.totalorder %s87, %s89
    %p93 = scmp.eq.s32.totalorder %s11, 0
    %p94 = por %p92, %p93
    %p95 = scmp.ne.s32.totalorder %s87, %s89
    %p96 = scmp.eq.s32.totalorder %s16, 1
    %p97 = por %p95, %p96
    %p98 = scmp.ne.s32.totalorder %s89, %s90
    %p99 = scmp.eq.s32.totalorder %s16, 0
    %p100 = por %p98, %p99
    %p101 = scmp.ne.s32.totalorder %s89, %s90
    %p102 = scmp.eq.s32.totalorder %s17, 1
    %p103 = por %p101, %p102
    %p105 = scmp.ne.s32.totalorder %s90, %s104
    %p106 = scmp.eq.s32.totalorder %s17, 0
    %p107 = por %p105, %p106
    %s109 = sadd.s32 %s108, 1
    %p112 = scmp.eq.s32.totalorder %s11, 1
    %p113 = scmp.ne.s32.totalorder %s108, %s110
    %p114 = scmp.eq.s32.totalorder %s11, 0
    %p115 = por %p113, %p114
    %p116 = scmp.ne.s32.totalorder %s108, %s110
    %p117 = scmp.eq.s32.totalorder %s16, 1
    %p118 = por %p116, %p117
    %p119 = scmp.ne.s32.totalorder %s110, %s111
    %p120 = scmp.eq.s32.totalorder %s16, 0
    %p121 = por %p119, %p120
    %p122 = scmp.ne.s32.totalorder %s110, %s111
    %p123 = scmp.eq.s32.totalorder %s17, 1
    %p124 = por %p122, %p123
    %p126 = scmp.ne.s32.totalorder %s111, %s125
    %p127 = scmp.eq.s32.totalorder %s17, 0
    %p128 = por %p126, %p127
    %s129 = ssub.s32 %s11, %s18
    %p130 = scmp.eq.s32.totalorder %s129, 0
    %s132 = sadd.s32 %s131, 1
    %s133 = scalar_select %p130, %s131, %s132
    %p136 = pneg %p130
    %p137 = scmp.eq.s32.totalorder %s11, 1
    %p138 = por %p136, %p137
    %p139 = scmp.ne.s32.totalorder %s131, %s134
    %p140 = scmp.eq.s32.totalorder %s11, 0
    %p141 = por %p139, %p140
    %p142 = scmp.ne.s32.totalorder %s131, %s134
    %p143 = scmp.eq.s32.totalorder %s16, 1
    %p144 = por %p142, %p143
    %p145 = scmp.ne.s32.totalorder %s134, %s135
    %p146 = scmp.eq.s32.totalorder %s16, 0
    %p147 = por %p145, %p146
    %p148 = scmp.ne.s32.totalorder %s134, %s135
    %p149 = scmp.eq.s32.totalorder %s17, 1
    %p150 = por %p148, %p149
    %p152 = scmp.ne.s32.totalorder %s135, %s151
    %p153 = scmp.eq.s32.totalorder %s17, 0
    %p154 = por %p152, %p153
    %p155 = scmp.le.s32.totalorder 1, %s11
    %p156 = scmp.lt.s32.totalorder %s11, 3
    %p157 = pnand %p155, %p156
    %p158 = pneg %p157
    // Predicated region
    $region9: #{conv2d_subsampling.1} parent=5 // pred_check
      _
    $region10: #{conv2d_subsampling.1} parent=5 // pred_check_branch
      %160 = sbr.rel (%p157) target = $region12
    $region11: #{conv2d_subsampling.1} parent=5 // pred_region
      %s161 = ssub.s32 %s11, 1
      // Predicated region
      $region13: #{conv2d_subsampling.1} parent=11 // pred_check
        %p162 = pneg %p58
      $region14: #{conv2d_subsampling.1} parent=11 // pred_check_branch
        %164 = sbr.rel (%p162) target = $region16
      $region15: #{conv2d_subsampling.1} parent=11 // pred_region
        _
      $region16: #{conv2d_subsampling.1} parent=11 // pred_fallthru
        _
      // Predicated region
      $region17: #{conv2d_subsampling.1} parent=11 // pred_check
        %p165 = pneg %p79
      $region18: #{conv2d_subsampling.1} parent=11 // pred_check_branch
        %167 = sbr.rel (%p165) target = $region20
      $region19: #{conv2d_subsampling.1} parent=11 // pred_region
        _
      $region20: #{conv2d_subsampling.1} parent=11 // pred_fallthru
        _
      // Predicated region
      $region21: #{conv2d_subsampling.1} parent=11 // pred_check
        %p168 = pneg %p100
      $region22: #{conv2d_subsampling.1} parent=11 // pred_check_branch
        %170 = sbr.rel (%p168) target = $region24
      $region23: #{conv2d_subsampling.1} parent=11 // pred_region
        _
      $region24: #{conv2d_subsampling.1} parent=11 // pred_fallthru
        _
      // Predicated region
      $region25: #{conv2d_subsampling.1} parent=11 // pred_check
        %p171 = pneg %p121
      $region26: #{conv2d_subsampling.1} parent=11 // pred_check_branch
        %173 = sbr.rel (%p171) target = $region28
      $region27: #{conv2d_subsampling.1} parent=11 // pred_region
        _
      $region28: #{conv2d_subsampling.1} parent=11 // pred_fallthru
        _
    $region12: #{conv2d_subsampling.1} parent=5 // pred_fallthru
      _
    %p174 = scmp.lt.s32.totalorder %s11, 2
    // Predicated region
    $region29: #{conv2d_subsampling.1} parent=5 // pred_check
      %p175 = pneg %p174
    $region30: #{conv2d_subsampling.1} parent=5 // pred_check_branch
      %177 = sbr.rel (%p175) target = $region32
    $region31: #{conv2d_subsampling.1} parent=5 // pred_region
      // Predicated region
      $region33: #{conv2d_subsampling.1} parent=31 // pred_check
        %p178 = pneg %p31
      $region34: #{conv2d_subsampling.1} parent=31 // pred_check_branch
        %180 = sbr.rel (%p178) target = $region36
      $region35: #{conv2d_subsampling.1} parent=31 // pred_region
        %p181 = scmp.lt.s32.totalorder %s11, 1
        %s182 = scalar_select %p181, %s11, 1
        %s183 = smul.addr %s182, 2
        %s184 = smul.addr %s183, 8
        %s185 = scalar_lea.vmem %s0, %s184
      $region36: #{conv2d_subsampling.1} parent=31 // pred_fallthru
        _
    $region32: #{conv2d_subsampling.1} parent=5 // pred_fallthru
      _
    %p186 = scmp.le.s32.totalorder 1, %s11
    %p187 = scmp.lt.s32.totalorder %s11, 3
    %p188 = pnand %p186, %p187
    %p189 = pneg %p188
    // Predicated region
    $region37: #{conv2d_subsampling.1} parent=5 // pred_check
      _
    $region38: #{conv2d_subsampling.1} parent=5 // pred_check_branch
      %191 = sbr.rel (%p188) target = $region40
    $region39: #{conv2d_subsampling.1} parent=5 // pred_region
      %s192 = ssub.s32 %s11, 1
      %p193 = scmp.lt.s32.totalorder %s16, 1
      %s194 = scalar_select %p193, %s16, 1
      %s195 = smul.addr %s194, 2
      %s196 = smul.addr %s195, 8
      %s197 = scalar_lea.vmem %s0, %s196
      %p198 = pneg %p37
      %p199 = pneg %p34
      %p200 = pneg %p58
      %p201 = pneg %p55
      %p202 = pneg %p79
      %p203 = pneg %p76
      %p204 = pneg %p100
      %p205 = pneg %p97
      %p206 = pneg %p121
      %p207 = pneg %p118
      %p208 = pneg %p147
      %p209 = pneg %p144
      %p210 = scmp.lt.s32.totalorder %s16, 1
      %s211 = scalar_select %p210, %s16, 1
      %s212 = smul.addr %s211, 4
      %s213 = scalar_lea.vmem %s5, %s212
      %p214 = scmp.lt.s32.totalorder %s16, 1
      %s215 = scalar_select %p214, %s16, 1
      %s216 = smul.addr %s215, 2
      %s217 = smul.addr %s216, 8
      %s218 = scalar_lea.vmem %s0, %s217
      %p219 = scmp.lt.s32.totalorder %s16, 1
      %s220 = scalar_select %p219, %s16, 1
      %s221 = smul.addr %s220, 4
      %s222 = scalar_lea.vmem %s5, %s221
      %v223 = vld [vmem:[%s2] sm:$0x1]
      %v224 = vld [vmem:[%s218] sm:$0x7f]
      %v225 = vld [vmem:[%s1] sm:$0xff]
      %v226 = vld [vmem:[%s1 + $0x8] sm:$0xff]
      %v227 = vld [vmem:[%s1 + $0x10] sm:$0xff]
      %v228 = vld [vmem:[%s1 + $0x18] sm:$0xff]
      %v229 = vld [vmem:[%s1 + $0x20] sm:$0xff]
      %v230 = vld [vmem:[%s1 + $0x28] sm:$0xff]
      %v231 = vld [vmem:[%s1 + $0x30] sm:$0xff]
      %v232 = vld [vmem:[%s1 + $0x38] sm:$0xff]
      %vm233 = vcmask 523264
      %v235 = vsel %vm233, %v224, 0
      %237 = vmatprep.subr.mxu0 0.0
      %238 = vmatpush1.msra.mxu0 0.0
      %239 = vmatprep.subr.mxu0 0.0
      %240 = vmatpush1.msra.mxu0 0.0
      %241 = vmatprep.subr.mxu0 0.0
      %242 = vmatpush1.msra.mxu0 0.0
      %243 = vmatprep.subr.mxu0 0.0
      %244 = vmatpush1.msra.mxu0 0.0
      %245 = vmatprep.subr.mxu0 0.0
      %246 = vmatpush1.msra.mxu0 0.0
      %247 = vmatprep.subr.mxu0 0.0
      %248 = vmatpush1.msra.mxu0 0.0
      %249 = vmatprep.subr.mxu0 0.0
      %250 = vmatpush1.msra.mxu0 0.0
      %251 = vmatprep.subr.mxu0 0.0
      %252 = vmatpush1.msra.mxu0 0.0
      %253 = vmatprep.subr.mxu0 0.0
      %254 = vmatpush1.msra.mxu0 %v232
      %255 = vmatprep.subr.mxu0 0.0
      %256 = vmatpush1.msra.mxu0 %v231
      %257 = vmatprep.subr.mxu0 0.0
      %258 = vmatpush1.msra.mxu0 %v230
      %259 = vmatprep.subr.mxu0 0.0
      %260 = vmatpush1.msra.mxu0 %v229
      %261 = vmatprep.subr.mxu0 0.0
      %262 = vmatpush1.msra.mxu0 %v228
      %263 = vmatprep.subr.mxu0 0.0
      %264 = vmatpush1.msra.mxu0 %v227
      %265 = vmatprep.subr.mxu0 0.0
      %266 = vmatpush1.msra.mxu0 %v226
      %267 = vmatprep.subr.mxu0 0.0
      %268 = vmatpush1.msra.mxu0 %v225
      %269 = vmatprep.subr.mxu0 0.0
      %270 = vmatpush2.msra.mxu0 0.0
      %271 = vmatprep.subr.mxu0 0.0
      %272 = vmatpush2.msra.mxu0 0.0
      %273 = vmatprep.subr.mxu0 0.0
      %274 = vmatpush2.msra.mxu0 0.0
      %275 = vmatprep.subr.mxu0 0.0
      %276 = vmatpush2.msra.mxu0 0.0
      %277 = vmatprep.subr.mxu0 0.0
      %278 = vmatpush2.msra.mxu0 0.0
      %279 = vmatprep.subr.mxu0 0.0
      %280 = vmatpush2.msra.mxu0 0.0
      %281 = vmatprep.subr.mxu0 0.0
      %282 = vmatpush2.msra.mxu0 0.0
      %283 = vmatprep.subr.mxu0 0.0
      %284 = vmatpush2.msra.mxu0 0.0
      %285 = vmatprep.subr.mxu0 0.0
      %286 = vmatpush2.msra.mxu0 0.0
      %287 = vmatprep.subr.mxu0 0.0
      %288 = vmatpush2.msra.mxu0 0.0
      %289 = vmatprep.subr.mxu0 0.0
      %290 = vmatpush2.msra.mxu0 0.0
      %291 = vmatprep.subr.mxu0 0.0
      %292 = vmatpush2.msra.mxu0 0.0
      %293 = vmatprep.subr.mxu0 0.0
      %294 = vmatpush2.msra.mxu0 0.0
      %295 = vmatprep.subr.mxu0 0.0
      %296 = vmatpush2.msra.mxu0 0.0
      %297 = vmatprep.subr.mxu0 0.0
      %298 = vmatpush2.msra.mxu0 0.0
      %299 = vmatprep.subr.mxu0 0.0
      %300 = vmatpush2.msra.mxu0 0.0
      %301 = vmatprep.mubr.f32.mxu0 0.0
      %302 = vmatmul.mubr.f32.gmra.mxu0 %v235
      %v303 = vpop.f32.mrf.mxu0
      %v304 = vadd.f32 0.0, %v303
      %v305 = vpop.f32.mrf.mxu0
      %306 = vdwg.mxu0
      %v308 = vlaneseq
      %v309 = vshrl.u32 %v308, 7
      %v310 = vsub.s32 0, %v309
      %v311 = vrot.slane %v223, %v310
      %v313 = vadd.f32 %v311, %v304
      %s314 = scalar_lea.vmem %s218, 8
      %v315 = vld [vmem:[%s314] sm:$0x7f]
      %s316 = scalar_lea.vmem %s1, 64
      %v317 = vld [vmem:[%s316] sm:$0xff]
      %v318 = vld [vmem:[%s316 + $0x8] sm:$0xff]
      %v319 = vld [vmem:[%s316 + $0x10] sm:$0xff]
      %v320 = vld [vmem:[%s316 + $0x18] sm:$0xff]
      %v321 = vld [vmem:[%s316 + $0x20] sm:$0xff]
      %v322 = vld [vmem:[%s316 + $0x28] sm:$0xff]
      %v323 = vld [vmem:[%s316 + $0x30] sm:$0xff]
      %v324 = vld [vmem:[%s316 + $0x38] sm:$0xff]
      %v326 = vsel %vm233, %v315, 0
      %328 = vmatprep.subr.mxu0 0.0
      %329 = vmatpush1.msra.mxu0 0.0
      %330 = vmatprep.subr.mxu0 0.0
      %331 = vmatpush1.msra.mxu0 0.0
      %332 = vmatprep.subr.mxu0 0.0
      %333 = vmatpush1.msra.mxu0 0.0
      %334 = vmatprep.subr.mxu0 0.0
      %335 = vmatpush1.msra.mxu0 0.0
      %336 = vmatprep.subr.mxu0 0.0
      %337 = vmatpush1.msra.mxu0 0.0
      %338 = vmatprep.subr.mxu0 0.0
      %339 = vmatpush1.msra.mxu0 0.0
      %340 = vmatprep.subr.mxu0 0.0
      %341 = vmatpush1.msra.mxu0 0.0
      %342 = vmatprep.subr.mxu0 0.0
      %343 = vmatpush1.msra.mxu0 0.0
      %344 = vmatprep.subr.mxu0 0.0
      %345 = vmatpush1.msra.mxu0 %v324
      %346 = vmatprep.subr.mxu0 0.0
      %347 = vmatpush1.msra.mxu0 %v323
      %348 = vmatprep.subr.mxu0 0.0
      %349 = vmatpush1.msra.mxu0 %v322
      %350 = vmatprep.subr.mxu0 0.0
      %351 = vmatpush1.msra.mxu0 %v321
      %352 = vmatprep.subr.mxu0 0.0
      %353 = vmatpush1.msra.mxu0 %v320
      %354 = vmatprep.subr.mxu0 0.0
      %355 = vmatpush1.msra.mxu0 %v319
      %356 = vmatprep.subr.mxu0 0.0
      %357 = vmatpush1.msra.mxu0 %v318
      %358 = vmatprep.subr.mxu0 0.0
      %359 = vmatpush1.msra.mxu0 %v317
      %360 = vmatprep.subr.mxu0 0.0
      %361 = vmatpush2.msra.mxu0 0.0
      %362 = vmatprep.subr.mxu0 0.0
      %363 = vmatpush2.msra.mxu0 0.0
      %364 = vmatprep.subr.mxu0 0.0
      %365 = vmatpush2.msra.mxu0 0.0
      %366 = vmatprep.subr.mxu0 0.0
      %367 = vmatpush2.msra.mxu0 0.0
      %368 = vmatprep.subr.mxu0 0.0
      %369 = vmatpush2.msra.mxu0 0.0
      %370 = vmatprep.subr.mxu0 0.0
      %371 = vmatpush2.msra.mxu0 0.0
      %372 = vmatprep.subr.mxu0 0.0
      %373 = vmatpush2.msra.mxu0 0.0
      %374 = vmatprep.subr.mxu0 0.0
      %375 = vmatpush2.msra.mxu0 0.0
      %376 = vmatprep.subr.mxu0 0.0
      %377 = vmatpush2.msra.mxu0 0.0
      %378 = vmatprep.subr.mxu0 0.0
      %379 = vmatpush2.msra.mxu0 0.0
      %380 = vmatprep.subr.mxu0 0.0
      %381 = vmatpush2.msra.mxu0 0.0
      %382 = vmatprep.subr.mxu0 0.0
      %383 = vmatpush2.msra.mxu0 0.0
      %384 = vmatprep.subr.mxu0 0.0
      %385 = vmatpush2.msra.mxu0 0.0
      %386 = vmatprep.subr.mxu0 0.0
      %387 = vmatpush2.msra.mxu0 0.0
      %388 = vmatprep.subr.mxu0 0.0
      %389 = vmatpush2.msra.mxu0 0.0
      %390 = vmatprep.subr.mxu0 0.0
      %391 = vmatpush2.msra.mxu0 0.0
      %392 = vmatprep.mubr.f32.mxu0 0.0
      %393 = vmatmul.mubr.f32.gmra.mxu0 %v326
      %v394 = vpop.f32.mrf.mxu0
      %v395 = vadd.f32 0.0, %v394
      %v396 = vpop.f32.mrf.mxu0
      %397 = vdwg.mxu0
      %v398 = vadd.f32 %v313, %v395
      %v399 = vld [vmem:[%s218 + $0x1] sm:$0x7f]
      %s400 = scalar_lea.vmem %s1, 128
      %v401 = vld [vmem:[%s400] sm:$0xff]
      %v402 = vld [vmem:[%s400 + $0x8] sm:$0xff]
      %v403 = vld [vmem:[%s400 + $0x10] sm:$0xff]
      %v404 = vld [vmem:[%s400 + $0x18] sm:$0xff]
      %v405 = vld [vmem:[%s400 + $0x20] sm:$0xff]
      %v406 = vld [vmem:[%s400 + $0x28] sm:$0xff]
      %v407 = vld [vmem:[%s400 + $0x30] sm:$0xff]
      %v408 = vld [vmem:[%s400 + $0x38] sm:$0xff]
      %v410 = vsel %vm233, %v399, 0
      %412 = vmatprep.subr.mxu0 0.0
      %413 = vmatpush1.msra.mxu0 0.0
      %414 = vmatprep.subr.mxu0 0.0
      %415 = vmatpush1.msra.mxu0 0.0
      %416 = vmatprep.subr.mxu0 0.0
      %417 = vmatpush1.msra.mxu0 0.0
      %418 = vmatprep.subr.mxu0 0.0
      %419 = vmatpush1.msra.mxu0 0.0
      %420 = vmatprep.subr.mxu0 0.0
      %421 = vmatpush1.msra.mxu0 0.0
      %422 = vmatprep.subr.mxu0 0.0
      %423 = vmatpush1.msra.mxu0 0.0
      %424 = vmatprep.subr.mxu0 0.0
      %425 = vmatpush1.msra.mxu0 0.0
      %426 = vmatprep.subr.mxu0 0.0
      %427 = vmatpush1.msra.mxu0 0.0
      %428 = vmatprep.subr.mxu0 0.0
      %429 = vmatpush1.msra.mxu0 %v408
      %430 = vmatprep.subr.mxu0 0.0
      %431 = vmatpush1.msra.mxu0 %v407
      %432 = vmatprep.subr.mxu0 0.0
      %433 = vmatpush1.msra.mxu0 %v406
      %434 = vmatprep.subr.mxu0 0.0
      %435 = vmatpush1.msra.mxu0 %v405
      %436 = vmatprep.subr.mxu0 0.0
      %437 = vmatpush1.msra.mxu0 %v404
      %438 = vmatprep.subr.mxu0 0.0
      %439 = vmatpush1.msra.mxu0 %v403
      %440 = vmatprep.subr.mxu0 0.0
      %441 = vmatpush1.msra.mxu0 %v402
      %442 = vmatprep.subr.mxu0 0.0
      %443 = vmatpush1.msra.mxu0 %v401
      %444 = vmatprep.subr.mxu0 0.0
      %445 = vmatpush2.msra.mxu0 0.0
      %446 = vmatprep.subr.mxu0 0.0
      %447 = vmatpush2.msra.mxu0 0.0
      %448 = vmatprep.subr.mxu0 0.0
      %449 = vmatpush2.msra.mxu0 0.0
      %450 = vmatprep.subr.mxu0 0.0
      %451 = vmatpush2.msra.mxu0 0.0
      %452 = vmatprep.subr.mxu0 0.0
      %453 = vmatpush2.msra.mxu0 0.0
      %454 = vmatprep.subr.mxu0 0.0
      %455 = vmatpush2.msra.mxu0 0.0
      %456 = vmatprep.subr.mxu0 0.0
      %457 = vmatpush2.msra.mxu0 0.0
      %458 = vmatprep.subr.mxu0 0.0
      %459 = vmatpush2.msra.mxu0 0.0
      %460 = vmatprep.subr.mxu0 0.0
      %461 = vmatpush2.msra.mxu0 0.0
      %462 = vmatprep.subr.mxu0 0.0
      %463 = vmatpush2.msra.mxu0 0.0
      %464 = vmatprep.subr.mxu0 0.0
      %465 = vmatpush2.msra.mxu0 0.0
      %466 = vmatprep.subr.mxu0 0.0
      %467 = vmatpush2.msra.mxu0 0.0
      %468 = vmatprep.subr.mxu0 0.0
      %469 = vmatpush2.msra.mxu0 0.0
      %470 = vmatprep.subr.mxu0 0.0
      %471 = vmatpush2.msra.mxu0 0.0
      %472 = vmatprep.subr.mxu0 0.0
      %473 = vmatpush2.msra.mxu0 0.0
      %474 = vmatprep.subr.mxu0 0.0
      %475 = vmatpush2.msra.mxu0 0.0
      %476 = vmatprep.mubr.f32.mxu0 0.0
      %477 = vmatmul.mubr.f32.gmra.mxu0 %v410
      %v478 = vpop.f32.mrf.mxu0
      %v479 = vadd.f32 0.0, %v478
      %v480 = vpop.f32.mrf.mxu0
      %481 = vdwg.mxu0
      %v482 = vadd.f32 %v398, %v479
      %v483 = vmax.f32 %v482, 0.0
      %v484 = vld [vmem:[%s4] sm:$0x1]
      %v486 = vrot.slane %v483, 1
      %v488 = vrot.slane %v483, 2
      %vm490 = vcmask 1040384
      %v491 = vsel %vm490, %v483, %v486
      %vm492 = vcmask 1041408
      %v493 = vsel %vm492, %v491, %v488
      %v494 = vld [vmem:[%s3] sm:$0xff]
      %v495 = vld [vmem:[%s3 + $0x8] sm:$0xff]
      %v496 = vld [vmem:[%s3 + $0x10] sm:$0xff]
      %v497 = vld [vmem:[%s3 + $0x18] sm:$0xff]
      %v498 = vld [vmem:[%s3 + $0x20] sm:$0xff]
      %v499 = vld [vmem:[%s3 + $0x28] sm:$0xff]
      %v500 = vld [vmem:[%s3 + $0x30] sm:$0xff]
      %vm501 = vcmask 457728
      %v503 = vsel %vm501, %v493, 0
      %505 = vmatprep.subr.mxu0 0.0
      %506 = vmatpush1.msra.mxu0 0.0
      %507 = vmatprep.subr.mxu0 0.0
      %508 = vmatpush1.msra.mxu0 0.0
      %509 = vmatprep.subr.mxu0 0.0
      %510 = vmatpush1.msra.mxu0 0.0
      %511 = vmatprep.subr.mxu0 0.0
      %512 = vmatpush1.msra.mxu0 0.0
      %513 = vmatprep.subr.mxu0 0.0
      %514 = vmatpush1.msra.mxu0 0.0
      %515 = vmatprep.subr.mxu0 0.0
      %516 = vmatpush1.msra.mxu0 0.0
      %517 = vmatprep.subr.mxu0 0.0
      %518 = vmatpush1.msra.mxu0 0.0
      %519 = vmatprep.subr.mxu0 0.0
      %520 = vmatpush1.msra.mxu0 0.0
      %521 = vmatprep.subr.mxu0 0.0
      %522 = vmatpush1.msra.mxu0 0.0
      %523 = vmatprep.subr.mxu0 0.0
      %524 = vmatpush1.msra.mxu0 %v500
      %525 = vmatprep.subr.mxu0 0.0
      %526 = vmatpush1.msra.mxu0 %v499
      %527 = vmatprep.subr.mxu0 0.0
      %528 = vmatpush1.msra.mxu0 %v498
      %529 = vmatprep.subr.mxu0 0.0
      %530 = vmatpush1.msra.mxu0 %v497
      %531 = vmatprep.subr.mxu0 0.0
      %532 = vmatpush1.msra.mxu0 %v496
      %533 = vmatprep.subr.mxu0 0.0
      %534 = vmatpush1.msra.mxu0 %v495
      %535 = vmatprep.subr.mxu0 0.0
      %536 = vmatpush1.msra.mxu0 %v494
      %537 = vmatprep.subr.mxu0 0.0
      %538 = vmatpush2.msra.mxu0 0.0
      %539 = vmatprep.subr.mxu0 0.0
      %540 = vmatpush2.msra.mxu0 0.0
      %541 = vmatprep.subr.mxu0 0.0
      %542 = vmatpush2.msra.mxu0 0.0
      %543 = vmatprep.subr.mxu0 0.0
      %544 = vmatpush2.msra.mxu0 0.0
      %545 = vmatprep.subr.mxu0 0.0
      %546 = vmatpush2.msra.mxu0 0.0
      %547 = vmatprep.subr.mxu0 0.0
      %548 = vmatpush2.msra.mxu0 0.0
      %549 = vmatprep.subr.mxu0 0.0
      %550 = vmatpush2.msra.mxu0 0.0
      %551 = vmatprep.subr.mxu0 0.0
      %552 = vmatpush2.msra.mxu0 0.0
      %553 = vmatprep.subr.mxu0 0.0
      %554 = vmatpush2.msra.mxu0 0.0
      %555 = vmatprep.subr.mxu0 0.0
      %556 = vmatpush2.msra.mxu0 0.0
      %557 = vmatprep.subr.mxu0 0.0
      %558 = vmatpush2.msra.mxu0 0.0
      %559 = vmatprep.subr.mxu0 0.0
      %560 = vmatpush2.msra.mxu0 0.0
      %561 = vmatprep.subr.mxu0 0.0
      %562 = vmatpush2.msra.mxu0 0.0
      %563 = vmatprep.subr.mxu0 0.0
      %564 = vmatpush2.msra.mxu0 0.0
      %565 = vmatprep.subr.mxu0 0.0
      %566 = vmatpush2.msra.mxu0 0.0
      %567 = vmatprep.subr.mxu0 0.0
      %568 = vmatpush2.msra.mxu0 0.0
      %569 = vmatprep.mubr.f32.mxu0 0.0
      %570 = vmatmul.mubr.f32.gmra.mxu0 %v503
      %v571 = vpop.f32.mrf.mxu0
      %v572 = vadd.f32 0.0, %v571
      %v573 = vpop.f32.mrf.mxu0
      %574 = vdwg.mxu0
      %v576 = vlaneseq
      %v577 = vshrl.u32 %v576, 7
      %v578 = vsub.s32 0, %v577
      %v579 = vrot.slane %v484, %v578
      %v581 = vadd.f32 %v579, %v572
      %v582 = vrot.slane %v483, 3
      %v584 = vsel %vm490, %v486, %v488
      %v585 = vsel %vm492, %v584, %v582
      %s586 = scalar_lea.vmem %s3, 56
      %v587 = vld [vmem:[%s586] sm:$0xff]
      %v588 = vld [vmem:[%s586 + $0x8] sm:$0xff]
      %v589 = vld [vmem:[%s586 + $0x10] sm:$0xff]
      %v590 = vld [vmem:[%s586 + $0x18] sm:$0xff]
      %v591 = vld [vmem:[%s586 + $0x20] sm:$0xff]
      %v592 = vld [vmem:[%s586 + $0x28] sm:$0xff]
      %v593 = vld [vmem:[%s586 + $0x30] sm:$0xff]
      %v595 = vsel %vm501, %v585, 0
      %597 = vmatprep.subr.mxu0 0.0
      %598 = vmatpush1.msra.mxu0 0.0
      %599 = vmatprep.subr.mxu0 0.0
      %600 = vmatpush1.msra.mxu0 0.0
      %601 = vmatprep.subr.mxu0 0.0
      %602 = vmatpush1.msra.mxu0 0.0
      %603 = vmatprep.subr.mxu0 0.0
      %604 = vmatpush1.msra.mxu0 0.0
      %605 = vmatprep.subr.mxu0 0.0
      %606 = vmatpush1.msra.mxu0 0.0
      %607 = vmatprep.subr.mxu0 0.0
      %608 = vmatpush1.msra.mxu0 0.0
      %609 = vmatprep.subr.mxu0 0.0
      %610 = vmatpush1.msra.mxu0 0.0
      %611 = vmatprep.subr.mxu0 0.0
      %612 = vmatpush1.msra.mxu0 0.0
      %613 = vmatprep.subr.mxu0 0.0
      %614 = vmatpush1.msra.mxu0 0.0
      %615 = vmatprep.subr.mxu0 0.0
      %616 = vmatpush1.msra.mxu0 %v593
      %617 = vmatprep.subr.mxu0 0.0
      %618 = vmatpush1.msra.mxu0 %v592
      %619 = vmatprep.subr.mxu0 0.0
      %620 = vmatpush1.msra.mxu0 %v591
      %621 = vmatprep.subr.mxu0 0.0
      %622 = vmatpush1.msra.mxu0 %v590
      %623 = vmatprep.subr.mxu0 0.0
      %624 = vmatpush1.msra.mxu0 %v589
      %625 = vmatprep.subr.mxu0 0.0
      %626 = vmatpush1.msra.mxu0 %v588
      %627 = vmatprep.subr.mxu0 0.0
      %628 = vmatpush1.msra.mxu0 %v587
      %629 = vmatprep.subr.mxu0 0.0
      %630 = vmatpush2.msra.mxu0 0.0
      %631 = vmatprep.subr.mxu0 0.0
      %632 = vmatpush2.msra.mxu0 0.0
      %633 = vmatprep.subr.mxu0 0.0
      %634 = vmatpush2.msra.mxu0 0.0
      %635 = vmatprep.subr.mxu0 0.0
      %636 = vmatpush2.msra.mxu0 0.0
      %637 = vmatprep.subr.mxu0 0.0
      %638 = vmatpush2.msra.mxu0 0.0
      %639 = vmatprep.subr.mxu0 0.0
      %640 = vmatpush2.msra.mxu0 0.0
      %641 = vmatprep.subr.mxu0 0.0
      %642 = vmatpush2.msra.mxu0 0.0
      %643 = vmatprep.subr.mxu0 0.0
      %644 = vmatpush2.msra.mxu0 0.0
      %645 = vmatprep.subr.mxu0 0.0
      %646 = vmatpush2.msra.mxu0 0.0
      %647 = vmatprep.subr.mxu0 0.0
      %648 = vmatpush2.msra.mxu0 0.0
      %649 = vmatprep.subr.mxu0 0.0
      %650 = vmatpush2.msra.mxu0 0.0
      %651 = vmatprep.subr.mxu0 0.0
      %652 = vmatpush2.msra.mxu0 0.0
      %653 = vmatprep.subr.mxu0 0.0
      %654 = vmatpush2.msra.mxu0 0.0
      %655 = vmatprep.subr.mxu0 0.0
      %656 = vmatpush2.msra.mxu0 0.0
      %657 = vmatprep.subr.mxu0 0.0
      %658 = vmatpush2.msra.mxu0 0.0
      %659 = vmatprep.subr.mxu0 0.0
      %660 = vmatpush2.msra.mxu0 0.0
      %661 = vmatprep.mubr.f32.mxu0 0.0
      %662 = vmatmul.mubr.f32.gmra.mxu0 %v595
      %v663 = vpop.f32.mrf.mxu0
      %v664 = vadd.f32 0.0, %v663
      %v665 = vpop.f32.mrf.mxu0
      %666 = vdwg.mxu0
      %v667 = vadd.f32 %v581, %v664
      %v668 = vrot.slane %v483, 4
      %v670 = vsel %vm490, %v488, %v582
      %v671 = vsel %vm492, %v670, %v668
      %s672 = scalar_lea.vmem %s3, 112
      %v673 = vld [vmem:[%s672] sm:$0xff]
      %v674 = vld [vmem:[%s672 + $0x8] sm:$0xff]
      %v675 = vld [vmem:[%s672 + $0x10] sm:$0xff]
      %v676 = vld [vmem:[%s672 + $0x18] sm:$0xff]
      %v677 = vld [vmem:[%s672 + $0x20] sm:$0xff]
      %v678 = vld [vmem:[%s672 + $0x28] sm:$0xff]
      %v679 = vld [vmem:[%s672 + $0x30] sm:$0xff]
      %v681 = vsel %vm501, %v671, 0
      %683 = vmatprep.subr.mxu0 0.0
      %684 = vmatpush1.msra.mxu0 0.0
      %685 = vmatprep.subr.mxu0 0.0
      %686 = vmatpush1.msra.mxu0 0.0
      %687 = vmatprep.subr.mxu0 0.0
      %688 = vmatpush1.msra.mxu0 0.0
      %689 = vmatprep.subr.mxu0 0.0
      %690 = vmatpush1.msra.mxu0 0.0
      %691 = vmatprep.subr.mxu0 0.0
      %692 = vmatpush1.msra.mxu0 0.0
      %693 = vmatprep.subr.mxu0 0.0
      %694 = vmatpush1.msra.mxu0 0.0
      %695 = vmatprep.subr.mxu0 0.0
      %696 = vmatpush1.msra.mxu0 0.0
      %697 = vmatprep.subr.mxu0 0.0
      %698 = vmatpush1.msra.mxu0 0.0
      %699 = vmatprep.subr.mxu0 0.0
      %700 = vmatpush1.msra.mxu0 0.0
      %701 = vmatprep.subr.mxu0 0.0
      %702 = vmatpush1.msra.mxu0 %v679
      %703 = vmatprep.subr.mxu0 0.0
      %704 = vmatpush1.msra.mxu0 %v678
      %705 = vmatprep.subr.mxu0 0.0
      %706 = vmatpush1.msra.mxu0 %v677
      %707 = vmatprep.subr.mxu0 0.0
      %708 = vmatpush1.msra.mxu0 %v676
      %709 = vmatprep.subr.mxu0 0.0
      %710 = vmatpush1.msra.mxu0 %v675
      %711 = vmatprep.subr.mxu0 0.0
      %712 = vmatpush1.msra.mxu0 %v674
      %713 = vmatprep.subr.mxu0 0.0
      %714 = vmatpush1.msra.mxu0 %v673
      %715 = vmatprep.subr.mxu0 0.0
      %716 = vmatpush2.msra.mxu0 0.0
      %717 = vmatprep.subr.mxu0 0.0
      %718 = vmatpush2.msra.mxu0 0.0
      %719 = vmatprep.subr.mxu0 0.0
      %720 = vmatpush2.msra.mxu0 0.0
      %721 = vmatprep.subr.mxu0 0.0
      %722 = vmatpush2.msra.mxu0 0.0
      %723 = vmatprep.subr.mxu0 0.0
      %724 = vmatpush2.msra.mxu0 0.0
      %725 = vmatprep.subr.mxu0 0.0
      %726 = vmatpush2.msra.mxu0 0.0
      %727 = vmatprep.subr.mxu0 0.0
      %728 = vmatpush2.msra.mxu0 0.0
      %729 = vmatprep.subr.mxu0 0.0
      %730 = vmatpush2.msra.mxu0 0.0
      %731 = vmatprep.subr.mxu0 0.0
      %732 = vmatpush2.msra.mxu0 0.0
      %733 = vmatprep.subr.mxu0 0.0
      %734 = vmatpush2.msra.mxu0 0.0
      %735 = vmatprep.subr.mxu0 0.0
      %736 = vmatpush2.msra.mxu0 0.0
      %737 = vmatprep.subr.mxu0 0.0
      %738 = vmatpush2.msra.mxu0 0.0
      %739 = vmatprep.subr.mxu0 0.0
      %740 = vmatpush2.msra.mxu0 0.0
      %741 = vmatprep.subr.mxu0 0.0
      %742 = vmatpush2.msra.mxu0 0.0
      %743 = vmatprep.subr.mxu0 0.0
      %744 = vmatpush2.msra.mxu0 0.0
      %745 = vmatprep.subr.mxu0 0.0
      %746 = vmatpush2.msra.mxu0 0.0
      %747 = vmatprep.mubr.f32.mxu0 0.0
      %748 = vmatmul.mubr.f32.gmra.mxu0 %v681
      %v749 = vpop.f32.mrf.mxu0
      %v750 = vadd.f32 0.0, %v749
      %v751 = vpop.f32.mrf.mxu0
      %752 = vdwg.mxu0
      %v753 = vadd.f32 %v667, %v750
      %v754 = vmax.f32 %v753, 0.0
      %vm755 = vcmask 190464
      %756 = vst.msk [vmem:[%s222] sm:$0x7] %vm755, %v754
      %p757 = scmp.lt.s32.totalorder %s16, 1
      %s758 = scalar_select %p757, %s16, 1
      %s759 = smul.addr %s758, 4
      %s760 = scalar_lea.vmem %s5, %s759
      // Predicated region
      $region41: #{conv2d_subsampling.1} parent=39 // pred_check
        %p761 = pneg %p144
      $region42: #{conv2d_subsampling.1} parent=39 // pred_check_branch
        %763 = sbr.rel (%p761) target = $region44
      $region43: #{conv2d_subsampling.1} parent=39 // pred_region
        _
      $region44: #{conv2d_subsampling.1} parent=39 // pred_fallthru
        _
    $region40: #{conv2d_subsampling.1} parent=5 // pred_fallthru
      _
    %p764 = scmp.le.s32.totalorder 2, %s11
    // Predicated region
    $region45: #{conv2d_subsampling.1} parent=5 // pred_check
      %p765 = pneg %p764
    $region46: #{conv2d_subsampling.1} parent=5 // pred_check_branch
      %767 = sbr.rel (%p765) target = $region48
    $region47: #{conv2d_subsampling.1} parent=5 // pred_region
      %s768 = ssub.s32 %s11, 2
      // Predicated region
      $region49: #{conv2d_subsampling.1} parent=47 // pred_check
        %p769 = pneg %p150
      $region50: #{conv2d_subsampling.1} parent=47 // pred_check_branch
        %771 = sbr.rel (%p769) target = $region52
      $region51: #{conv2d_subsampling.1} parent=47 // pred_region
        %p772 = scmp.lt.s32.totalorder %s17, 1
        %s773 = scalar_select %p772, %s17, 1
        %s774 = smul.addr %s773, 4
        %s775 = scalar_lea.vmem %s5, %s774
      $region52: #{conv2d_subsampling.1} parent=47 // pred_fallthru
        _
    $region48: #{conv2d_subsampling.1} parent=5 // pred_fallthru
      _
  $region6: #{conv2d_subsampling.1} parent=0 // loop_footer
    %s15 = sadd.s32 1, %s11
  $region7: #{conv2d_subsampling.1} parent=0 // loop_footer_branch
    %10 = sbr.rel target = $region3
  $region8: #{conv2d_subsampling.1} parent=0 // loop_exit
    _

</llo_original>
